<compile_context>
chip_gen: v6e
topology: v6e:2x2x1
jax: 0.10.0
libtpu: 0.0.40
codegen_flags: <defaults>
</compile_context>

<pallas_src>
import functools
import math

import jax
import jax.numpy as jnp
from jax.experimental import pallas as pl
from jax.experimental.pallas import tpu as pltpu

NEG_SLOPE = 0.01  # F.leaky_relu default negative_slope

_LANE = 128
_SUBLANE = 8
_VMEM_BUDGET = 28 * 1024 * 1024   # keep tiles under v7x's 32 MiB scoped default


def _round_up(a, b):
    return ((a + b - 1) // b) * b


def _default_elementwise_dtype():
    """bf16 elementwise on chips with a bf16 VALU (v6e/v7x), f32 otherwise."""
    try:
        kind = jax.devices()[0].device_kind.lower()
    except Exception:
        return jnp.float32
    if any(v in kind for v in ("v2", "v3", "v4", "v5")):
        return jnp.float32
    return jnp.bfloat16


def _postnet_kernel(x_ref, w_ref, b_ref, o_ref, *, ew_dtype):
    # ---- leaky_relu (bf16 on v6e/v7x, f32 on v5e) ----
    x = x_ref[...].astype(ew_dtype)
    a = jnp.where(x >= 0, x, jnp.asarray(NEG_SLOPE, ew_dtype) * x)

    # ---- fc3: Linear (bf16 MXU operands, f32 accumulation) ----
    y = jnp.dot(a.astype(w_ref.dtype), w_ref[...],
                preferred_element_type=jnp.float32)
    y = y + b_ref[...]                      # (tm, NCp) + (1, NCp)

    o_ref[...] = y.astype(o_ref.dtype)


def prepare_postnet_params(w, b, *, matmul_dtype=jnp.bfloat16):
    """One-time (parameter-load-time) prep: pad n_class to 128 lanes + cast.

    w: (d_model, n_class) [= PyTorch weight.T]; b: (n_class,).
    Hoisted out of the per-call path per the perf review.
    """
    _, NC = w.shape
    NC_pad = _round_up(NC, _LANE)           # lane-dense output (no masked vst)
    w_p, b_p = w, b
    if NC_pad != NC:
        w_p = jnp.pad(w_p, ((0, 0), (0, NC_pad - NC)))
        b_p = jnp.pad(b_p, ((0, NC_pad - NC),))
    w_p = w_p.astype(matmul_dtype)          # halve weight VMEM / DMA
    b_p = b_p.reshape(1, NC_pad).astype(jnp.float32)
    return w_p, b_p, NC


def _vmem_footprint(tm, D, NC_pad, x_isz, w_isz, out_isz, ew_isz):
    return (2 * tm * D * x_isz              # double-buffered x tiles
            + 2 * tm * NC_pad * out_isz     # double-buffered out tiles
            + D * NC_pad * w_isz            # single-buffered weight
            + NC_pad * 4                    # bias
            + tm * NC_pad * 4               # f32 accumulator
            + tm * D * ew_isz)              # elementwise temporary


def postnet(x, w_p, b_p, n_class, *, tm=1024, elementwise_dtype=None):
    """x: (..., d_model); (w_p, b_p, n_class) from prepare_postnet_params."""
    *lead, D = x.shape
    NC_pad = w_p.shape[1]
    N = math.prod(lead) if lead else 1

    if N == 0:                              # zero-sized leading dim guard
        return jnp.zeros((*lead, n_class), dtype=x.dtype)

    if elementwise_dtype is None:
        elementwise_dtype = _default_elementwise_dtype()

    x_isz = jnp.dtype(x.dtype).itemsize
    w_isz = jnp.dtype(w_p.dtype).itemsize
    ew_isz = jnp.dtype(elementwise_dtype).itemsize

    # ---- row tile: big (amortize per-step overhead) but VMEM-bounded ----
    tm_eff = min(tm, _round_up(N, _SUBLANE))
    tm_eff = _round_up(tm_eff, _SUBLANE)
    while (tm_eff > _SUBLANE and
           _vmem_footprint(tm_eff, D, NC_pad, x_isz, w_isz, x_isz, ew_isz)
           > _VMEM_BUDGET):
        tm_eff = _round_up(tm_eff // 2, _SUBLANE)

    x2d = x.reshape(N, D)
    # No wrapper-side row padding: cdiv grid, Pallas masks boundary writes.
    grid = (pl.cdiv(N, tm_eff),)

    # D is passed at full extent in both x and w specs (exempt from the
    # (8,128) rule), so no garbage ever enters the contraction dimension.
    row_spec = pl.BlockSpec((tm_eff, D), lambda i: (i, 0))
    out_spec = pl.BlockSpec((tm_eff, NC_pad), lambda i: (i, 0))
    # Grid-invariant operands: single-buffered (no useless double buffering).
    w_spec = pl.BlockSpec((D, NC_pad), lambda i: (0, 0),
                          pipeline_mode=pl.Buffered(1))
    b_spec = pl.BlockSpec((1, NC_pad), lambda i: (0, 0),
                          pipeline_mode=pl.Buffered(1))

    footprint = _vmem_footprint(tm_eff, D, NC_pad, x_isz, w_isz, x_isz, ew_isz)
    vmem_limit = int(max(footprint + (4 << 20), 16 << 20))

    cost = pl.CostEstimate(
        flops=int(2 * N * D * NC_pad),
        transcendentals=0,
        bytes_accessed=int(N * D * x_isz
                           + D * NC_pad * w_isz
                           + NC_pad * 4
                           + N * NC_pad * x_isz),
    )

    out = pl.pallas_call(
        functools.partial(_postnet_kernel, ew_dtype=elementwise_dtype),
        out_shape=jax.ShapeDtypeStruct((N, NC_pad), x.dtype),
        grid_spec=pltpu.PrefetchScalarGridSpec(
            num_scalar_prefetch=0,
            grid=grid,
            in_specs=[row_spec, w_spec, b_spec],
            out_specs=out_spec,
        ),
        compiler_params=pltpu.CompilerParams(
            dimension_semantics=("parallel",),
            vmem_limit_bytes=vmem_limit,
        ),
        cost_estimate=cost,
    )(x2d, w_p, b_p)

    # TODO(synk): if the consumer can take the padded (N, NC_pad) layout,
    # defer this de-padding slice into the next op's BlockSpec instead.
    out = out[:, :n_class]
    return out.reshape(*lead, n_class)


def _reference(x, w, b):
    """Pure-JAX mirror of PostNet.forward (f32)."""
    a = jnp.where(x >= 0, x, NEG_SLOPE * x)
    return a @ w + b


if __name__ == "__main__":
    batch, seq, d_model, n_class = 2, 8, 32, 16

    key = jax.random.PRNGKey(0)
    kx, kw, kb = jax.random.split(key, 3)

    x = jax.random.normal(kx, (batch, seq, d_model), dtype=jnp.float32)

    # nn.Linear-style init; weight kept pre-transposed to (in, out).
    scale = 1.0 / jnp.sqrt(jnp.float32(d_model))
    w = jax.random.uniform(kw, (d_model, n_class), jnp.float32, -scale, scale)
    b = jax.random.uniform(kb, (n_class,), jnp.float32, -scale, scale)

    # Parameter prep is hoisted out of the per-call path (load-time cost).
    w_p, b_p, nc = prepare_postnet_params(w, b)

    out = postnet(x, w_p, b_p, nc)
    out = jax.block_until_ready(out)

    ref = _reference(x, w, b)
    assert out.shape == (batch, seq, n_class)
    # bf16 MXU operands with f32 accumulation -> relaxed tolerance vs f32 ref.
    assert jnp.allclose(out, ref, atol=5e-2, rtol=5e-2), "mismatch vs reference"

    print("KERNEL_OK")
</pallas_src>

<mosaic_0001>
module attributes {stable_mosaic.version = 11 : i64} {
  func.func @_postnet_kernel(%arg0: i32, %arg1: memref<16x32xf32, #tpu.memory_space<vmem>>, %arg2: memref<32x128xbf16, #tpu.memory_space<vmem>>, %arg3: memref<1x128xf32, #tpu.memory_space<vmem>>, %arg4: memref<16x128xf32, #tpu.memory_space<vmem>>) attributes {dimension_semantics = [#tpu.dimension_semantics<parallel>], iteration_bounds = array<i64: 1>, scalar_prefetch = 0 : i64, scratch_operands = 0 : i64, tpu.core_type = #tpu.core_type<tc>, window_params = [{transform_indices = @transform_0, window_bounds = array<i64: 16, 32>}, {pipeline_mode = #tpu.pipeline_mode<synchronous>, transform_indices = @transform_1, window_bounds = array<i64: 32, 128>}, {pipeline_mode = #tpu.pipeline_mode<synchronous>, transform_indices = @transform_2, window_bounds = array<i64: 1, 128>}, {transform_indices = @transform_3, window_bounds = array<i64: 16, 128>}]} {
    %c0 = arith.constant 0 : index
    %c0_0 = arith.constant 0 : index
    %0 = vector.load %arg1[%c0, %c0_0] : memref<16x32xf32, #tpu.memory_space<vmem>>, vector<16x32xf32>
    %1 = arith.truncf %0 : vector<16x32xf32> to vector<16x32xbf16>
    %cst = arith.constant 0.000000e+00 : bf16
    %2 = vector.broadcast %cst : bf16 to vector<16x32xbf16>
    %3 = arith.cmpf oge, %1, %2 : vector<16x32xbf16>
    %cst_1 = arith.constant 1.000980e-02 : bf16
    %4 = vector.broadcast %cst_1 : bf16 to vector<16x32xbf16>
    %5 = arith.mulf %4, %1 : vector<16x32xbf16>
    %6 = arith.select %3, %1, %5 : vector<16x32xi1>, vector<16x32xbf16>
    %c0_2 = arith.constant 0 : index
    %c0_3 = arith.constant 0 : index
    %7 = vector.load %arg2[%c0_2, %c0_3] : memref<32x128xbf16, #tpu.memory_space<vmem>>, vector<32x128xbf16>
    %cst_4 = arith.constant dense<0.000000e+00> : vector<16x128xf32>
    %8 = tpu.matmul %6, %7, %cst_4 {dimension_numbers = #tpu.dot_dimension_numbers<[1], [0], [0], [1], [0, 0, 1, 1], [], []>} : vector<16x32xbf16>, vector<32x128xbf16>, vector<16x128xf32> -> vector<16x128xf32>
    %c0_5 = arith.constant 0 : index
    %c0_6 = arith.constant 0 : index
    %9 = vector.load %arg3[%c0_5, %c0_6] : memref<1x128xf32, #tpu.memory_space<vmem>>, vector<1x128xf32>
    %10 = vector.broadcast %9 : vector<1x128xf32> to vector<16x128xf32>
    %11 = arith.addf %8, %10 : vector<16x128xf32>
    %c0_7 = arith.constant 0 : index
    %c0_8 = arith.constant 0 : index
    %12 = vector.load %arg4[%c0_7, %c0_8] : memref<16x128xf32, #tpu.memory_space<vmem>>, vector<16x128xf32>
    tpu.vector_store %arg4[%c0_7, %c0_8], %11 {strides = array<i32>} : memref<16x128xf32, #tpu.memory_space<vmem>>, vector<16x128xf32>,
    return
  }
  func.func @transform_0(%arg0: i32) -> (i32, i32) {
    %c0_i32 = arith.constant 0 : i32
    %c0_i32_0 = arith.constant 0 : i32
    return %arg0, %c0_i32 : i32, i32
  }
  func.func @transform_1(%arg0: i32) -> (i32, i32) {
    %c0_i32 = arith.constant 0 : i32
    %c0_i32_0 = arith.constant 0 : i32
    %c0_i32_1 = arith.constant 0 : i32
    return %c0_i32, %c0_i32_0 : i32, i32
  }
  func.func @transform_2(%arg0: i32) -> (i32, i32) {
    %c0_i32 = arith.constant 0 : i32
    %c0_i32_0 = arith.constant 0 : i32
    %c0_i32_1 = arith.constant 0 : i32
    return %c0_i32, %c0_i32_0 : i32, i32
  }
  func.func @transform_3(%arg0: i32) -> (i32, i32) {
    %c0_i32 = arith.constant 0 : i32
    %c0_i32_0 = arith.constant 0 : i32
    return %arg0, %c0_i32 : i32, i32
  }
}

</mosaic_0001>

<llo_original>
// kernel: tpu_custom_call.1
$region0: #{tpu_custom_call.1}
  #allocation0 [shape = 'u32[]', space=smem, size = 0x4, offset = 0x4, fixed_abs, tag = 'smem constant byte address 0x4 - core index']
  #allocation1 [shape = 'u32[144,128]{1,0:T(1,128)}', space=vmem, size = 0x12000, scoped, tag = 'internal scratch']
  %s0 = inlined_call_operand.hbm [shape: f32[16,32], index: 0, kind: input, shape index: {}]
  %s1 = inlined_call_operand.hbm [shape: bf16[32,128], index: 1, kind: input, shape index: {}]
  %s2 = inlined_call_operand.vmem [shape: f32[1,128], index: 2, kind: input, shape index: {}]
  %s3 = inlined_call_operand.hbm [shape: f32[16,128], index: 3, kind: output, shape index: {}]
  %s4 = sld [smem:[#allocation0]]
  $region30: #{tpu_custom_call.1} parent=0
    _
  %s6 = ssub.s32 1, %s4
  %s7 = scalar_select 0, %s6, %s4
  $region1: #{tpu_custom_call.1} parent=0
    #allocation2 [shape = 'u8[8192]{0}', space=vmem, size = 0x2000, scoped, tag = 'input window, operand 0, single buffered']
    #allocation3 [shape = 's32[1]{0}', space=sflag, size = 0x4, scoped, tag = 'scoped memory for tpu_custom_call.1']
    #allocation4 [shape = 's32[1]{0}', space=sflag, size = 0x4, scoped, tag = 'scoped memory for tpu_custom_call.1']
    #allocation5 [shape = 'u8[8192]{0}', space=vmem, size = 0x2000, scoped, tag = 'input window, operand 1, single buffered']
    #allocation6 [shape = 's32[1]{0}', space=sflag, size = 0x4, scoped, tag = 'scoped memory for tpu_custom_call.1']
    #allocation7 [shape = 'u8[8192]{0}', space=vmem, size = 0x2000, scoped, tag = 'output window, operand 0, single buffered']
    %8 = vsyncpa [#allocation3], 0
    %9 = vsyncpa [#allocation6], 0
    %10 = vsyncpa [#allocation4], 0
    // Predicated region
    $region2: #{tpu_custom_call.1} parent=1 // pred_check
      _
    $region3: #{tpu_custom_call.1} parent=1 // pred_check_branch
      %12 = sbr.rel (0) target = $region5
    $region4: #{tpu_custom_call.1} parent=1 // pred_region
      %s14 = ssub.s32 256, 256
      %15 = vsyncadd [#allocation3], %s14
      %s16 = sshll.u32 [#allocation2], 4
      %s17 = int_to_ptr.vmem [resolvable:$true] %s16
      %22 = dma.hbm_to_vmem [thread:$0]  %s0, 256, %s17, [#allocation3], 128, 128, 8
    $region5: #{tpu_custom_call.1} parent=1 // pred_fallthru
      _
    // Predicated region
    $region6: #{tpu_custom_call.1} parent=1 // pred_check
      _
    $region7: #{tpu_custom_call.1} parent=1 // pred_check_branch
      %24 = sbr.rel (0) target = $region9
    $region8: #{tpu_custom_call.1} parent=1 // pred_region
      %s26 = ssub.s32 256, 256
      %27 = vsyncadd [#allocation6], %s26
      %s28 = sshll.u32 [#allocation5], 4
      %s29 = int_to_ptr.vmem [resolvable:$true] %s28
      %34 = dma.hbm_to_vmem [thread:$0]  %s1, 256, %s29, [#allocation6], 64, 64, 4
    $region9: #{tpu_custom_call.1} parent=1 // pred_fallthru
      _
    // Predicated region
    $region10: #{tpu_custom_call.1} parent=1 // pred_check
      _
    $region11: #{tpu_custom_call.1} parent=1 // pred_check_branch
      %36 = sbr.rel (0) target = $region13
    $region12: #{tpu_custom_call.1} parent=1 // pred_region
      _
    $region13: #{tpu_custom_call.1} parent=1 // pred_fallthru
      _
    // Predicated region
    $region14: #{tpu_custom_call.1} parent=1 // pred_check
      _
    $region15: #{tpu_custom_call.1} parent=1 // pred_check_branch
      %38 = sbr.rel (0) target = $region17
    $region16: #{tpu_custom_call.1} parent=1 // pred_region
      %39 = dma.done [#allocation3], 256
    $region17: #{tpu_custom_call.1} parent=1 // pred_fallthru
      _
    // Predicated region
    $region18: #{tpu_custom_call.1} parent=1 // pred_check
      _
    $region19: #{tpu_custom_call.1} parent=1 // pred_check_branch
      %41 = sbr.rel (0) target = $region21
    $region20: #{tpu_custom_call.1} parent=1 // pred_region
      %42 = dma.done [#allocation6], 256
    $region21: #{tpu_custom_call.1} parent=1 // pred_fallthru
      _
    %v45 = vld [vmem:[#allocation2] sm:$0xff]
    %v46 = vld [vmem:[#allocation2 + $0x8] sm:$0xff]
    %v47 = vpack.c.bf16 %v46, %v45
    %vm48 = vcmp.ge.bf16.partialorder %v47, 0
    %v49 = vmul.bf16 %v47, 1009007652
    %v50 = vsel %vm48, %v47, %v49
    %v51 = vld [vmem:[#allocation5] sm:$0xf]
    %v52 = vld [vmem:[#allocation5 + $0x4] sm:$0xf]
    %v53 = vld [vmem:[#allocation5 + $0x8] sm:$0xf]
    %v54 = vld [vmem:[#allocation5 + $0xc] sm:$0xf]
    %v55 = vld [vmem:[%s2] sm:$0x1]
    %v57 = vlaneseq
    %v58 = vshrl.u32 %v57, 7
    %v59 = vsub.s32 0, %v58
    %v60 = vrot.slane %v55, %v59
    %v66 = vunpack.c.l.b16 %v51
    %v67 = vunpack.c.l.b16 %v52
    %v68 = vunpack.c.l.b16 %v53
    %v69 = vunpack.c.l.b16 %v54
    %v70 = vpack.c.b16 %v67, %v66
    %v71 = vpack.c.b16 %v69, %v68
    %vm74 = vcmask 261120
    %v76 = vsel %vm74, %v50, 0
    %78 = vmatprep.subr.bf16.mxu0 0
    %79 = vmatpush1.bf16.msra.mxu0 0
    %80 = vmatprep.subr.bf16.mxu0 0
    %81 = vmatpush1.bf16.msra.mxu0 0
    %82 = vmatprep.subr.bf16.mxu0 0
    %83 = vmatpush1.bf16.msra.mxu0 0
    %84 = vmatprep.subr.bf16.mxu0 0
    %85 = vmatpush1.bf16.msra.mxu0 0
    %86 = vmatprep.subr.bf16.mxu0 0
    %87 = vmatpush1.bf16.msra.mxu0 0
    %88 = vmatprep.subr.bf16.mxu0 0
    %89 = vmatpush1.bf16.msra.mxu0 0
    %90 = vmatprep.subr.bf16.mxu0 0
    %91 = vmatpush1.bf16.msra.mxu0 %v71
    %92 = vmatprep.subr.bf16.mxu0 0
    %93 = vmatpush1.bf16.msra.mxu0 %v70
    %94 = vmatprep.subr.bf16.mxu0 0
    %95 = vmatpush2.bf16.msra.mxu0 0
    %96 = vmatprep.subr.bf16.mxu0 0
    %97 = vmatpush2.bf16.msra.mxu0 0
    %98 = vmatprep.subr.bf16.mxu0 0
    %99 = vmatpush2.bf16.msra.mxu0 0
    %100 = vmatprep.subr.bf16.mxu0 0
    %101 = vmatpush2.bf16.msra.mxu0 0
    %102 = vmatprep.subr.bf16.mxu0 0
    %103 = vmatpush2.bf16.msra.mxu0 0
    %104 = vmatprep.subr.bf16.mxu0 0
    %105 = vmatpush2.bf16.msra.mxu0 0
    %106 = vmatprep.subr.bf16.mxu0 0
    %107 = vmatpush2.bf16.msra.mxu0 0
    %108 = vmatprep.subr.bf16.mxu0 0
    %109 = vmatpush2.bf16.msra.mxu0 0
    %110 = vmatprep.mubr.bf16.mxu0 0
    %111 = vmatmul.mubr.bf16.gmra.mxu0 %v76
    %v112 = vpop.f32.mrf.mxu0
    %v113 = vadd.f32 %v60, %v112
    %v114 = vpop.f32.mrf.mxu0
    %v115 = vpop.f32.mrf.mxu0
    %v116 = vadd.f32 %v60, %v115
    %v117 = vpop.f32.mrf.mxu0
    %118 = vdwg.mxu0
    %119 = vst [vmem:[#allocation7] sm:$0xff] %v113
    %120 = vst [vmem:[#allocation7 + $0x8] sm:$0xff] %v116
    // Predicated region
    $region22: #{tpu_custom_call.1} parent=1 // pred_check
      _
    $region23: #{tpu_custom_call.1} parent=1 // pred_check_branch
      %122 = sbr.rel (0) target = $region25
    $region24: #{tpu_custom_call.1} parent=1 // pred_region
      %s124 = ssub.s32 256, 256
      %125 = vsyncadd [#allocation4], %s124
      %s126 = sshll.u32 [#allocation7], 4
      %s127 = int_to_ptr.vmem [resolvable:$true] %s126
      %132 = dma.vmem_to_hbm [thread:$0]  %s127, 256, %s3, [#allocation4], 128, 128, 8
    $region25: #{tpu_custom_call.1} parent=1 // pred_fallthru
      _
    // Predicated region
    $region26: #{tpu_custom_call.1} parent=1 // pred_check
      _
    $region27: #{tpu_custom_call.1} parent=1 // pred_check_branch
      %134 = sbr.rel (0) target = $region29
    $region28: #{tpu_custom_call.1} parent=1 // pred_region
      %135 = dma.done [#allocation4], 256
    $region29: #{tpu_custom_call.1} parent=1 // pred_fallthru
      _
    %136 = vsyncpa [#allocation3], 1
    %137 = vsyncpa [#allocation6], 1
    %138 = vsyncpa [#allocation4], 1

</llo_original>
